<compile_context>
chip_gen: v5e
topology: v5e:2x2
jax: 0.10.0
libtpu: 0.0.40
codegen_flags: <defaults>
</compile_context>

<pallas_src>
import functools
import math
from collections import namedtuple

import jax
import jax.numpy as jnp
from jax.experimental import pallas as pl
from jax.experimental.pallas import tpu as pltpu


_LANE = 128      # last-dim (lane) alignment
_SUBLANE = 8     # second-to-last (sublane) alignment

# Generation-aware limits: VMEM budget used for tile fitting, vmem_limit_bytes
# passed to the compiler (None -> keep compiler default), largest tile per
# node dim, and number of TensorCores per chip.
_GEN_CFG = {
    "v5e": dict(vmem_budget=96 << 20, vmem_limit=100 << 20, max_tile=1024, num_tc=1),
    "v6e": dict(vmem_budget=96 << 20, vmem_limit=100 << 20, max_tile=1024, num_tc=1),
    "v7x": dict(vmem_budget=44 << 20, vmem_limit=48 << 20, max_tile=512, num_tc=2),
    "unknown": dict(vmem_budget=24 << 20, vmem_limit=None, max_tile=512, num_tc=1),
}


@functools.lru_cache(maxsize=1)
def _tpu_generation():
    try:
        kind = jax.devices()[0].device_kind.lower()
    except Exception:
        return "unknown"
    if "v7" in kind:
        return "v7x"
    if "v6" in kind:
        return "v6e"
    if "v5" in kind:
        return "v5e"
    return "unknown"


def _round_up(x, m):
    return ((x + m - 1) // m) * m


def _halve_aligned(t, align=_LANE):
    return max(align, ((t // 2) // align) * align)


def _pick_tile(dim, cap, align=_LANE):
    """Largest MXU-friendly tile <= cap (multiple of align), no gross padding waste."""
    t = min(cap, _round_up(dim, align))
    t = max(align, (t // align) * align)
    while t > align:
        waste = _round_up(dim, t) - dim
        if 4 * waste <= max(dim, 4 * align):
            break
        nt = _halve_aligned(t, align)
        if nt == t:
            break
        t = nt
    return t


def _pad2d(x, rows, cols):
    r, c = x.shape
    if r == rows and c == cols:
        return x
    return jnp.pad(x, ((0, rows - r), (0, cols - c)))


def _compiler_params(gen):
    cfg = _GEN_CFG[gen]
    kwargs = dict(dimension_semantics=("parallel", "parallel", "arbitrary"))
    if cfg["vmem_limit"] is not None:
        kwargs["vmem_limit_bytes"] = int(cfg["vmem_limit"])
    return pltpu.CompilerParams(**kwargs)


# ----------------------------------------------------------------------------
# Fused kernel: out[i, j] = sum_k adj[i, k] @ (x[k, :] @ w[:, j])  (+ bias)
# The in_features axis is carried as one full (padded) slab, so the support
# slab for the current k-tile of nodes is produced on the MXU and consumed
# immediately -- it never round-trips through HBM.
# ----------------------------------------------------------------------------
_FusedPlan = namedtuple("_FusedPlan", "tm tk tn if_p mp kp npad gen")


def _fused_plan(n_nodes, in_f, out_f, op_dtype):
    gen = _tpu_generation()
    cfg = _GEN_CFG[gen]
    it = jnp.dtype(op_dtype).itemsize

    if_p = _round_up(in_f, _LANE)
    # tn covers all (padded) out_features: adj's index_map is (i, k), so every
    # extra j block would re-read the whole N x N adjacency from HBM.
    tn = _round_up(out_f, _LANE)
    tm = _pick_tile(n_nodes, cfg["max_tile"])   # output rows (MXU M dim)
    tk = _pick_tile(n_nodes, cfg["max_tile"])   # contraction over nodes

    def ws(tm_, tk_, tn_):
        # 2x double-buffered input blocks + 2x f32 output block
        # + compiler-materialized (tk, tn) f32 support slab + f32 bias row.
        return (2 * (tm_ * tk_ + tk_ * if_p + if_p * tn_) * it
                + 2 * tm_ * tn_ * 4
                + tk_ * tn_ * 4
                + 2 * tn_ * 4)

    budget = cfg["vmem_budget"]
    while ws(tm, tk, tn) > budget:
        if tk > _LANE:
            tk = _halve_aligned(tk)
        elif tm > _LANE:
            tm = _halve_aligned(tm)
        elif tn > _LANE:
            tn = _halve_aligned(tn)
        else:
            break

    mp = _round_up(n_nodes, tm)
    kp = _round_up(n_nodes, tk)
    npad = _round_up(out_f, tn)

    # Megacore: only on chips with 2 TensorCores (v7x).  Keep >= 2 parallel
    # (i, j) blocks; halve tm only as a last resort and never below 256.
    if cfg["num_tc"] >= 2:
        while (mp // tm) * (npad // tn) < cfg["num_tc"] and tm >= 512:
            tm = _halve_aligned(tm)
            mp = _round_up(n_nodes, tm)

    return _FusedPlan(tm, tk, tn, if_p, mp, kp, npad, gen)


def _gcn_fused_body(adj_ref, x_ref, w_ref, o_ref, bias_ref):
    k = pl.program_id(2)

    @pl.when(k == 0)
    def _():
        if bias_ref is None:
            o_ref[...] = jnp.zeros_like(o_ref)
        else:
            # Initialize the resident accumulator with the broadcast bias:
            # bias add is free, and every k iteration is identical.
            o_ref[...] = jnp.broadcast_to(bias_ref[...], o_ref.shape).astype(o_ref.dtype)

    # support slab for this k-tile of nodes: [tk, tn]
    support = jnp.dot(x_ref[...], w_ref[...], preferred_element_type=jnp.float32)
    o_ref[...] += jnp.dot(adj_ref[...], support.astype(adj_ref.dtype),
                          preferred_element_type=jnp.float32)


def _gcn_fused_bias_kernel(adj_ref, x_ref, w_ref, bias_ref, o_ref):
    _gcn_fused_body(adj_ref, x_ref, w_ref, o_ref, bias_ref)


def _gcn_fused_nobias_kernel(adj_ref, x_ref, w_ref, o_ref):
    _gcn_fused_body(adj_ref, x_ref, w_ref, o_ref, None)


def gcn_fused(x, adj, weight, bias=None, *, compute_dtype=jnp.bfloat16,
              adj_prepared=None, plan=None):
    """adj @ (x @ weight) (+ bias) in a single Pallas call; f32 result."""
    n_nodes, in_f = x.shape
    in_f2, out_f = weight.shape
    assert in_f == in_f2, (x.shape, weight.shape)
    assert adj.shape == (n_nodes, n_nodes), adj.shape

    op_dtype = jnp.dtype(compute_dtype) if compute_dtype is not None else x.dtype
    if plan is None:
        plan = _fused_plan(n_nodes, in_f, out_f, op_dtype)
    tm, tk, tn = plan.tm, plan.tk, plan.tn
    if_p, mp, kp, npad = plan.if_p, plan.mp, plan.kp, plan.npad

    if adj_prepared is None:
        adj_prepared = _pad2d(adj, mp, kp).astype(op_dtype)
    x_p = _pad2d(x, kp, if_p).astype(op_dtype)
    w_p = _pad2d(weight, if_p, npad).astype(op_dtype)

    in_specs = [
        pl.BlockSpec((tm, tk), lambda i, j, k: (i, k)),      # adj tile
        pl.BlockSpec((tk, if_p), lambda i, j, k: (k, 0)),    # x slab (full in_f)
        pl.BlockSpec((if_p, tn), lambda i, j, k: (0, j)),    # weight slab
    ]
    args = [adj_prepared, x_p, w_p]
    if bias is not None:
        bias_p = jnp.pad(bias.astype(jnp.float32).reshape(1, -1),
                         ((0, 0), (0, npad - out_f)))
        in_specs.append(pl.BlockSpec((1, tn), lambda i, j, k: (0, j)))
        args.append(bias_p)
        kernel = _gcn_fused_bias_kernel
    else:
        kernel = _gcn_fused_nobias_kernel

    out_p = pl.pallas_call(
        kernel,
        out_shape=jax.ShapeDtypeStruct((mp, npad), jnp.float32),
        grid_spec=pltpu.PrefetchScalarGridSpec(
            num_scalar_prefetch=0,
            grid=(mp // tm, npad // tn, kp // tk),
            in_specs=in_specs,
            out_specs=pl.BlockSpec((tm, tn), lambda i, j, k: (i, j)),
        ),
        compiler_params=_compiler_params(plan.gen),
    )(*args)

    return out_p[:n_nodes, :out_f]


# ----------------------------------------------------------------------------
# Generic tiled matmul (+ optional fused bias) -- two-pass fallback for wide
# in_features where recomputing the support slab per row-block does not pay.
# ----------------------------------------------------------------------------
_MMPlan = namedtuple("_MMPlan", "tm tk tn mp kp npad gen")


def _mm_plan(m, kdim, n, op_dtype):
    gen = _tpu_generation()
    cfg = _GEN_CFG[gen]
    it = jnp.dtype(op_dtype).itemsize

    tm = _pick_tile(m, cfg["max_tile"])
    tk = _pick_tile(kdim, cfg["max_tile"])
    tn = _round_up(n, _LANE)

    def ws(tm_, tk_, tn_):
        return 2 * (tm_ * tk_ + tk_ * tn_) * it + 2 * tm_ * tn_ * 4 + 2 * tn_ * 4

    budget = cfg["vmem_budget"]
    while ws(tm, tk, tn) > budget:
        if tk > _LANE:
            tk = _halve_aligned(tk)
        elif tn > _LANE:
            tn = _halve_aligned(tn)
        elif tm > _LANE:
            tm = _halve_aligned(tm)
        else:
            break

    mp = _round_up(m, tm)
    kp = _round_up(kdim, tk)
    npad = _round_up(n, tn)

    if cfg["num_tc"] >= 2:
        while (mp // tm) * (npad // tn) < cfg["num_tc"] and tm >= 512:
            tm = _halve_aligned(tm)
            mp = _round_up(m, tm)

    return _MMPlan(tm, tk, tn, mp, kp, npad, gen)


def _mm_body(a_ref, b_ref, o_ref, bias_ref):
    k = pl.program_id(2)

    @pl.when(k == 0)
    def _():
        if bias_ref is None:
            o_ref[...] = jnp.zeros_like(o_ref)
        else:
            o_ref[...] = jnp.broadcast_to(bias_ref[...], o_ref.shape).astype(o_ref.dtype)

    o_ref[...] += jnp.dot(a_ref[...], b_ref[...], preferred_element_type=jnp.float32)


def _mm_bias_kernel(a_ref, b_ref, bias_ref, o_ref):
    _mm_body(a_ref, b_ref, o_ref, bias_ref)


def _mm_nobias_kernel(a_ref, b_ref, o_ref):
    _mm_body(a_ref, b_ref, o_ref, None)


def pallas_matmul(a, b, bias=None, *, compute_dtype=jnp.bfloat16):
    """a @ b (+ bias), tiled, padded to hardware-friendly shapes; f32 result."""
    m, kdim = a.shape
    kdim2, n = b.shape
    assert kdim == kdim2, (a.shape, b.shape)

    op_dtype = jnp.dtype(compute_dtype) if compute_dtype is not None else a.dtype
    plan = _mm_plan(m, kdim, n, op_dtype)
    tm, tk, tn = plan.tm, plan.tk, plan.tn
    mp, kp, npad = plan.mp, plan.kp, plan.npad

    a_p = _pad2d(a, mp, kp).astype(op_dtype)
    b_p = _pad2d(b, kp, npad).astype(op_dtype)

    in_specs = [
        pl.BlockSpec((tm, tk), lambda i, j, k: (i, k)),
        pl.BlockSpec((tk, tn), lambda i, j, k: (k, j)),
    ]
    args = [a_p, b_p]
    if bias is not None:
        bias_p = jnp.pad(bias.astype(jnp.float32).reshape(1, -1),
                         ((0, 0), (0, npad - n)))
        in_specs.append(pl.BlockSpec((1, tn), lambda i, j, k: (0, j)))
        args.append(bias_p)
        kernel = _mm_bias_kernel
    else:
        kernel = _mm_nobias_kernel

    out_p = pl.pallas_call(
        kernel,
        out_shape=jax.ShapeDtypeStruct((mp, npad), jnp.float32),
        grid_spec=pltpu.PrefetchScalarGridSpec(
            num_scalar_prefetch=0,
            grid=(mp // tm, npad // tn, kp // tk),
            in_specs=in_specs,
            out_specs=pl.BlockSpec((tm, tn), lambda i, j, k: (i, j)),
        ),
        compiler_params=_compiler_params(plan.gen),
    )(*args)

    return out_p[:m, :n]


class GraphConvolutionDense:
    """JAX/Pallas port of GraphConvolution_dense (forward pass only)."""

    def __init__(self, in_features, out_features, bias=True, key=None,
                 compute_dtype=jnp.bfloat16):
        self.in_features = in_features
        self.out_features = out_features
        # bf16 operands / f32 accumulation by default (mem-bound regime on all
        # generations); pass compute_dtype=jnp.float32 for reference numerics.
        self.compute_dtype = (jnp.dtype(compute_dtype)
                              if compute_dtype is not None else jnp.dtype(jnp.float32))

        key = jax.random.PRNGKey(0) if key is None else key
        kw, kb = jax.random.split(key)
        stdv = 1.0 / math.sqrt(out_features)
        self.weight = jax.random.uniform(
            kw, (in_features, out_features), jnp.float32, minval=-stdv, maxval=stdv
        )
        if bias:
            self.bias = jax.random.uniform(
                kb, (out_features,), jnp.float32, minval=-stdv, maxval=stdv
            )
        else:
            self.bias = None

        # Cache of the padded / dtype-cast adjacency (adj is typically reused
        # every layer & epoch): avoids re-streaming NxN through HBM per call.
        self._adj_cache = None   # (src_array, (mp, kp, dtype_name), padded)

    def _prepare_adj(self, adj, mp, kp, op_dtype):
        key = (mp, kp, jnp.dtype(op_dtype).name)
        c = self._adj_cache
        if c is not None and c[0] is adj and c[1] == key:
            return c[2]
        adj_p = _pad2d(adj, mp, kp).astype(op_dtype)
        self._adj_cache = (adj, key, adj_p)
        return adj_p

    def __call__(self, x, adj, w=None, b=None, *, force_path=None):
        weight = self.weight if w is None else w
        bias = None
        if self.bias is not None:          # matches PyTorch: b only used when
            bias = self.bias if b is None else b   # the layer has a bias param

        n_nodes, in_f = x.shape
        out_f = weight.shape[1]
        op_dtype = self.compute_dtype

        plan = _fused_plan(n_nodes, in_f, out_f, op_dtype)
        grid_i = plan.mp // plan.tm
        # Fused-path recompute overhead of support is an extra if_p/tm fraction
        # of the adj-matmul MXU work, paid once per output row-block.  Fuse
        # only when that is free (single row-block) or negligible (<= 25%).
        fuse = (grid_i == 1) or (4 * plan.if_p <= plan.tm)
        if force_path == "fused":
            fuse = True
        elif force_path == "two_pass":
            fuse = False

        if fuse:
            adj_p = self._prepare_adj(adj, plan.mp, plan.kp, op_dtype)
            return gcn_fused(x, adj, weight, bias, compute_dtype=op_dtype,
                             adj_prepared=adj_p, plan=plan)

        # Wide-input fallback: two tiled matmuls, bias fused into the second.
        support = pallas_matmul(x, weight, None, compute_dtype=op_dtype)
        return pallas_matmul(adj, support, bias, compute_dtype=op_dtype)


def _reference(x, adj, weight, bias):
    hi = jax.lax.Precision.HIGHEST
    out = jnp.dot(adj, jnp.dot(x, weight, precision=hi), precision=hi)
    if bias is not None:
        out = out + bias
    return out


if __name__ == "__main__":
    # --- Demo-sized GCN layer (fused single-kernel path, bf16 default) ------
    N = 64
    in_features = 32
    out_features = 32

    root = jax.random.PRNGKey(0)
    kx, kadj, kparams = jax.random.split(root, 3)

    x = jax.random.normal(kx, (N, in_features), jnp.float32)
    adj = jax.random.uniform(kadj, (N, N), jnp.float32)
    adj = adj / jnp.sum(adj, axis=1, keepdims=True)   # row-normalized dense adj

    layer = GraphConvolutionDense(in_features, out_features, bias=True, key=kparams)

    out = jax.block_until_ready(layer(x, adj))        # w=None, b=None -> internal params
    ref = _reference(x, adj, layer.weight, layer.bias)
    assert out.shape == (N, out_features)
    assert out.dtype == jnp.float32
    err = float(jnp.max(jnp.abs(out - ref)))
    assert err < 5e-2, err                            # bf16 operands, f32 accumulate

    # Second call with the same adj exercises the padded/cast-adj cache.
    out_again = jax.block_until_ready(layer(x, adj))
    assert jnp.allclose(out, out_again)

    # Same kernel with f32 operands: tight check against HIGHEST-precision ref.
    layer_f32 = GraphConvolutionDense(in_features, out_features, bias=True,
                                      key=kparams, compute_dtype=jnp.float32)
    layer_f32.weight = layer.weight
    layer_f32.bias = layer.bias
    out32 = jax.block_until_ready(layer_f32(x, adj))
    assert jnp.allclose(out32, ref, atol=1e-4, rtol=1e-4), float(
        jnp.max(jnp.abs(out32 - ref)))

    # --- Ragged shapes + explicit w/b override + forced two-matmul fallback --
    N2, if2, of2 = 72, 200, 48
    k1, k2, k3, k4 = jax.random.split(jax.random.PRNGKey(1), 4)
    x2 = jax.random.normal(k1, (N2, if2), jnp.float32)
    adj2 = jax.random.uniform(k2, (N2, N2), jnp.float32)
    adj2 = adj2 / jnp.sum(adj2, axis=1, keepdims=True)
    w2 = jax.random.normal(k3, (if2, of2), jnp.float32) * 0.05
    b2 = jax.random.normal(k4, (of2,), jnp.float32)

    layer2 = GraphConvolutionDense(if2, of2, bias=True, key=kparams,
                                   compute_dtype=jnp.float32)
    out2 = jax.block_until_ready(layer2(x2, adj2, w2, b2, force_path="two_pass"))
    ref2 = _reference(x2, adj2, w2, b2)
    assert out2.shape == (N2, of2)
    assert jnp.allclose(out2, ref2, atol=1e-2, rtol=1e-2), float(
        jnp.max(jnp.abs(out2 - ref2)))

    # --- No-bias variant through the fused path -----------------------------
    layer3 = GraphConvolutionDense(if2, of2, bias=False, key=kparams,
                                   compute_dtype=jnp.float32)
    out3 = jax.block_until_ready(layer3(x2, adj2, w2, None))
    ref3 = _reference(x2, adj2, w2, None)
    assert jnp.allclose(out3, ref3, atol=1e-2, rtol=1e-2), float(
        jnp.max(jnp.abs(out3 - ref3)))

    print("KERNEL_OK")
</pallas_src>

<mosaic_0001>
module attributes {stable_mosaic.version = 11 : i64} {
  func.func @_gcn_fused_bias_kernel(%arg0: i32, %arg1: i32, %arg2: i32, %arg3: memref<128x128xbf16, #tpu.memory_space<vmem>>, %arg4: memref<128x128xbf16, #tpu.memory_space<vmem>>, %arg5: memref<128x128xbf16, #tpu.memory_space<vmem>>, %arg6: memref<1x128xf32, #tpu.memory_space<vmem>>, %arg7: memref<128x128xf32, #tpu.memory_space<vmem>>) attributes {dimension_semantics = [#tpu.dimension_semantics<parallel>, #tpu.dimension_semantics<parallel>, #tpu.dimension_semantics<arbitrary>], iteration_bounds = array<i64: 1, 1, 1>, scalar_prefetch = 0 : i64, scratch_operands = 0 : i64, tpu.core_type = #tpu.core_type<tc>, window_params = [{transform_indices = @transform_0, window_bounds = array<i64: 128, 128>}, {transform_indices = @transform_1, window_bounds = array<i64: 128, 128>}, {transform_indices = @transform_2, window_bounds = array<i64: 128, 128>}, {transform_indices = @transform_3, window_bounds = array<i64: 1, 128>}, {transform_indices = @transform_4, window_bounds = array<i64: 128, 128>}]} {
    %c0_i32 = arith.constant 0 : i32
    %0 = arith.cmpi eq, %arg2, %c0_i32 : i32
    %1 = arith.extui %0 : i1 to i32
    %c0_i32_0 = arith.constant 0 : i32
    %2 = arith.cmpi ne, %1, %c0_i32_0 : i32
    scf.if %2 {
      %c0_11 = arith.constant 0 : index
      %c0_12 = arith.constant 0 : index
      %12 = vector.load %arg6[%c0_11, %c0_12] : memref<1x128xf32, #tpu.memory_space<vmem>>, vector<1x128xf32>
      %13 = vector.shape_cast %12 : vector<1x128xf32> to vector<1x128xf32>
      %14 = vector.broadcast %13 : vector<1x128xf32> to vector<128x128xf32>
      %c0_13 = arith.constant 0 : index
      %c0_14 = arith.constant 0 : index
      %15 = vector.load %arg7[%c0_13, %c0_14] : memref<128x128xf32, #tpu.memory_space<vmem>>, vector<128x128xf32>
      tpu.vector_store %arg7[%c0_13, %c0_14], %14 {strides = array<i32>} : memref<128x128xf32, #tpu.memory_space<vmem>>, vector<128x128xf32>,
    } else {
    }
    %c0 = arith.constant 0 : index
    %c0_1 = arith.constant 0 : index
    %3 = vector.load %arg4[%c0, %c0_1] : memref<128x128xbf16, #tpu.memory_space<vmem>>, vector<128x128xbf16>
    %c0_2 = arith.constant 0 : index
    %c0_3 = arith.constant 0 : index
    %4 = vector.load %arg5[%c0_2, %c0_3] : memref<128x128xbf16, #tpu.memory_space<vmem>>, vector<128x128xbf16>
    %cst = arith.constant dense<0.000000e+00> : vector<128x128xf32>
    %5 = tpu.matmul %3, %4, %cst {dimension_numbers = #tpu.dot_dimension_numbers<[1], [0], [0], [1], [0, 0, 1, 1], [], []>} : vector<128x128xbf16>, vector<128x128xbf16>, vector<128x128xf32> -> vector<128x128xf32>
    %c0_4 = arith.constant 0 : index
    %c0_5 = arith.constant 0 : index
    %6 = vector.load %arg7[%c0_4, %c0_5] : memref<128x128xf32, #tpu.memory_space<vmem>>, vector<128x128xf32>
    %c0_6 = arith.constant 0 : index
    %c0_7 = arith.constant 0 : index
    %7 = vector.load %arg3[%c0_6, %c0_7] : memref<128x128xbf16, #tpu.memory_space<vmem>>, vector<128x128xbf16>
    %8 = arith.truncf %5 : vector<128x128xf32> to vector<128x128xbf16>
    %cst_8 = arith.constant dense<0.000000e+00> : vector<128x128xf32>
    %9 = tpu.matmul %7, %8, %cst_8 {dimension_numbers = #tpu.dot_dimension_numbers<[1], [0], [0], [1], [0, 0, 1, 1], [], []>} : vector<128x128xbf16>, vector<128x128xbf16>, vector<128x128xf32> -> vector<128x128xf32>
    %10 = arith.addf %6, %9 : vector<128x128xf32>
    %c0_9 = arith.constant 0 : index
    %c0_10 = arith.constant 0 : index
    %11 = vector.load %arg7[%c0_9, %c0_10] : memref<128x128xf32, #tpu.memory_space<vmem>>, vector<128x128xf32>
    tpu.vector_store %arg7[%c0_9, %c0_10], %10 {strides = array<i32>} : memref<128x128xf32, #tpu.memory_space<vmem>>, vector<128x128xf32>,
    return
  }
  func.func @transform_0(%arg0: i32, %arg1: i32, %arg2: i32) -> (i32, i32) {
    %c0_i32 = arith.constant 0 : i32
    return %arg0, %arg2 : i32, i32
  }
  func.func @transform_1(%arg0: i32, %arg1: i32, %arg2: i32) -> (i32, i32) {
    %c0_i32 = arith.constant 0 : i32
    %c0_i32_0 = arith.constant 0 : i32
    return %arg2, %c0_i32 : i32, i32
  }
  func.func @transform_2(%arg0: i32, %arg1: i32, %arg2: i32) -> (i32, i32) {
    %c0_i32 = arith.constant 0 : i32
    %c0_i32_0 = arith.constant 0 : i32
    return %c0_i32, %arg1 : i32, i32
  }
  func.func @transform_3(%arg0: i32, %arg1: i32, %arg2: i32) -> (i32, i32) {
    %c0_i32 = arith.constant 0 : i32
    %c0_i32_0 = arith.constant 0 : i32
    return %c0_i32, %arg1 : i32, i32
  }
  func.func @transform_4(%arg0: i32, %arg1: i32, %arg2: i32) -> (i32, i32) {
    %c0_i32 = arith.constant 0 : i32
    return %arg0, %arg1 : i32, i32
  }
}

</mosaic_0001>

<llo_original>
// kernel: tpu_custom_call.1
$region0: #{tpu_custom_call.1}
  #allocation0 [shape = 'u32[]', space=smem, size = 0x4, offset = 0x4, fixed_abs, tag = 'smem constant byte address 0x4 - core index']
  #allocation1 [shape = 'u32[72,128]{1,0:T(1,128)}', space=vmem, size = 0x9000, scoped, tag = 'internal scratch']
  %s0 = inlined_call_operand.hbm [shape: bf16[128,128], index: 0, kind: input, shape index: {}]
  %s1 = inlined_call_operand.hbm [shape: bf16[128,128], index: 1, kind: input, shape index: {}]
  %s2 = inlined_call_operand.hbm [shape: bf16[128,128], index: 2, kind: input, shape index: {}]
  %s3 = inlined_call_operand.vmem [shape: f32[1,128], index: 3, kind: input, shape index: {}]
  %s4 = inlined_call_operand.hbm [shape: f32[128,128], index: 4, kind: output, shape index: {}]
  %s5 = sld [smem:[#allocation0]]
  $region42: #{tpu_custom_call.1} parent=0
    _
  %s7 = ssub.s32 1, %s5
  %s8 = scalar_select 0, %s7, %s5
  $region1: #{tpu_custom_call.1} parent=0
    #allocation2 [shape = 'u8[32768]{0}', space=vmem, size = 0x8000, scoped, tag = 'input window, operand 0, single buffered']
    #allocation3 [shape = 's32[1]{0}', space=sflag, size = 0x4, scoped, tag = 'scoped memory for tpu_custom_call.1']
    #allocation4 [shape = 's32[1]{0}', space=sflag, size = 0x4, scoped, tag = 'scoped memory for tpu_custom_call.1']
    #allocation5 [shape = 'u8[32768]{0}', space=vmem, size = 0x8000, scoped, tag = 'input window, operand 1, single buffered']
    #allocation6 [shape = 's32[1]{0}', space=sflag, size = 0x4, scoped, tag = 'scoped memory for tpu_custom_call.1']
    #allocation7 [shape = 'u8[32768]{0}', space=vmem, size = 0x8000, scoped, tag = 'input window, operand 2, single buffered']
    #allocation8 [shape = 'u8[65536]{0}', space=vmem, size = 0x10000, scoped, tag = 'output window, operand 0, single buffered']
    %9 = vsyncpa [#allocation3], 0
    %10 = vsyncpa [#allocation6], 0
    %11 = vsyncpa [#allocation4], 0
    // Predicated region
    $region2: #{tpu_custom_call.1} parent=1 // pred_check
      _
    $region3: #{tpu_custom_call.1} parent=1 // pred_check_branch
      %13 = sbr.rel (0) target = $region5
    $region4: #{tpu_custom_call.1} parent=1 // pred_region
      %15 = vsyncadd [#allocation3], 0
      %s16 = sshll.u32 %s0, 4
      %s17 = int_to_ptr.hbm [resolvable:$true] %s16
      %s18 = sshll.u32 [#allocation2], 4
      %s19 = int_to_ptr.vmem [resolvable:$true] %s18
      %24 = dma.hbm_to_vmem [thread:$0]  %s17, 1024, %s19, [#allocation3], 64, 64, 4
    $region5: #{tpu_custom_call.1} parent=1 // pred_fallthru
      _
    // Predicated region
    $region6: #{tpu_custom_call.1} parent=1 // pred_check
      _
    $region7: #{tpu_custom_call.1} parent=1 // pred_check_branch
      %26 = sbr.rel (0) target = $region9
    $region8: #{tpu_custom_call.1} parent=1 // pred_region
      %28 = vsyncadd [#allocation6], 0
      %s29 = sshll.u32 %s1, 4
      %s30 = int_to_ptr.hbm [resolvable:$true] %s29
      %s31 = sshll.u32 [#allocation5], 4
      %s32 = int_to_ptr.vmem [resolvable:$true] %s31
      %37 = dma.hbm_to_vmem [thread:$0]  %s30, 1024, %s32, [#allocation6], 64, 64, 4
    $region9: #{tpu_custom_call.1} parent=1 // pred_fallthru
      _
    // Predicated region
    $region10: #{tpu_custom_call.1} parent=1 // pred_check
      _
    $region11: #{tpu_custom_call.1} parent=1 // pred_check_branch
      %39 = sbr.rel (0) target = $region13
    $region12: #{tpu_custom_call.1} parent=1 // pred_region
      %41 = vsyncadd [#allocation6], 0
      %s42 = sshll.u32 %s2, 4
      %s43 = int_to_ptr.hbm [resolvable:$true] %s42
      %s44 = sshll.u32 [#allocation7], 4
      %s45 = int_to_ptr.vmem [resolvable:$true] %s44
      %50 = dma.hbm_to_vmem [thread:$0]  %s43, 1024, %s45, [#allocation6], 64, 64, 4
    $region13: #{tpu_custom_call.1} parent=1 // pred_fallthru
      _
    // Predicated region
    $region14: #{tpu_custom_call.1} parent=1 // pred_check
      _
    $region15: #{tpu_custom_call.1} parent=1 // pred_check_branch
      %52 = sbr.rel (0) target = $region17
    $region16: #{tpu_custom_call.1} parent=1 // pred_region
      _
    $region17: #{tpu_custom_call.1} parent=1 // pred_fallthru
      _
    // Predicated region
    $region18: #{tpu_custom_call.1} parent=1 // pred_check
      _
    $region19: #{tpu_custom_call.1} parent=1 // pred_check_branch
      %54 = sbr.rel (0) target = $region21
    $region20: #{tpu_custom_call.1} parent=1 // pred_region
      %56 = dma.done [#allocation3], 1024
    $region21: #{tpu_custom_call.1} parent=1 // pred_fallthru
      _
    // Predicated region
    $region22: #{tpu_custom_call.1} parent=1 // pred_check
      _
    $region23: #{tpu_custom_call.1} parent=1 // pred_check_branch
      %58 = sbr.rel (0) target = $region25
    $region24: #{tpu_custom_call.1} parent=1 // pred_region
      %60 = dma.done [#allocation6], 1024
    $region25: #{tpu_custom_call.1} parent=1 // pred_fallthru
      _
    // Predicated region
    $region26: #{tpu_custom_call.1} parent=1 // pred_check
      _
    $region27: #{tpu_custom_call.1} parent=1 // pred_check_branch
      %62 = sbr.rel (0) target = $region29
    $region28: #{tpu_custom_call.1} parent=1 // pred_region
      %64 = dma.done [#allocation6], 1024
    $region29: #{tpu_custom_call.1} parent=1 // pred_fallthru
      _
    %p65 = scmp.eq.s32.totalorder 0, 0
    // Predicated region
    $region30: #{tpu_custom_call.1} parent=1 // pred_check
      %p66 = pneg %p65
    $region31: #{tpu_custom_call.1} parent=1 // pred_check_branch
      %68 = sbr.rel (%p66) target = $region33
    $region32: #{tpu_custom_call.1} parent=1 // pred_region
      %v69 = vld [vmem:[%s3] sm:$0x1]
      %v71 = vperm.slane %v69, 0
      %73 = vst [vmem:[#allocation8] sm:$0xff] %v71
      %74 = vst [vmem:[#allocation8 + $0x8] sm:$0xff] %v71
      %75 = vst [vmem:[#allocation8 + $0x10] sm:$0xff] %v71
      %76 = vst [vmem:[#allocation8 + $0x18] sm:$0xff] %v71
      %77 = vst [vmem:[#allocation8 + $0x20] sm:$0xff] %v71
      %78 = vst [vmem:[#allocation8 + $0x28] sm:$0xff] %v71
      %79 = vst [vmem:[#allocation8 + $0x30] sm:$0xff] %v71
      %80 = vst [vmem:[#allocation8 + $0x38] sm:$0xff] %v71
      %81 = vst [vmem:[#allocation8 + $0x40] sm:$0xff] %v71
      %82 = vst [vmem:[#allocation8 + $0x48] sm:$0xff] %v71
      %83 = vst [vmem:[#allocation8 + $0x50] sm:$0xff] %v71
      %84 = vst [vmem:[#allocation8 + $0x58] sm:$0xff] %v71
      %85 = vst [vmem:[#allocation8 + $0x60] sm:$0xff] %v71
      %86 = vst [vmem:[#allocation8 + $0x68] sm:$0xff] %v71
      %87 = vst [vmem:[#allocation8 + $0x70] sm:$0xff] %v71
      %88 = vst [vmem:[#allocation8 + $0x78] sm:$0xff] %v71
    $region33: #{tpu_custom_call.1} parent=1 // pred_fallthru
      _
    %v89 = vld [vmem:[#allocation5] sm:$0xf]
    %v90 = vld [vmem:[#allocation5 + $0x4] sm:$0xf]
    %v91 = vld [vmem:[#allocation5 + $0x8] sm:$0xf]
    %v92 = vld [vmem:[#allocation5 + $0xc] sm:$0xf]
    %v93 = vld [vmem:[#allocation5 + $0x10] sm:$0xf]
    %v94 = vld [vmem:[#allocation5 + $0x14] sm:$0xf]
    %v95 = vld [vmem:[#allocation5 + $0x18] sm:$0xf]
    %v96 = vld [vmem:[#allocation5 + $0x1c] sm:$0xf]
    %v97 = vld [vmem:[#allocation5 + $0x20] sm:$0xf]
    %v98 = vld [vmem:[#allocation5 + $0x24] sm:$0xf]
    %v99 = vld [vmem:[#allocation5 + $0x28] sm:$0xf]
    %v100 = vld [vmem:[#allocation5 + $0x2c] sm:$0xf]
    %v101 = vld [vmem:[#allocation5 + $0x30] sm:$0xf]
    %v102 = vld [vmem:[#allocation5 + $0x34] sm:$0xf]
    %v103 = vld [vmem:[#allocation5 + $0x38] sm:$0xf]
    %v104 = vld [vmem:[#allocation5 + $0x3c] sm:$0xf]
    %v105 = vld [vmem:[#allocation7] sm:$0xf]
    %v106 = vld [vmem:[#allocation7 + $0x4] sm:$0xf]
    %v107 = vld [vmem:[#allocation7 + $0x8] sm:$0xf]
    %v108 = vld [vmem:[#allocation7 + $0xc] sm:$0xf]
    %v109 = vld [vmem:[#allocation7 + $0x10] sm:$0xf]
    %v110 = vld [vmem:[#allocation7 + $0x14] sm:$0xf]
    %v111 = vld [vmem:[#allocation7 + $0x18] sm:$0xf]
    %v112 = vld [vmem:[#allocation7 + $0x1c] sm:$0xf]
    %v113 = vld [vmem:[#allocation7 + $0x20] sm:$0xf]
    %v114 = vld [vmem:[#allocation7 + $0x24] sm:$0xf]
    %v115 = vld [vmem:[#allocation7 + $0x28] sm:$0xf]
    %v116 = vld [vmem:[#allocation7 + $0x2c] sm:$0xf]
    %v117 = vld [vmem:[#allocation7 + $0x30] sm:$0xf]
    %v118 = vld [vmem:[#allocation7 + $0x34] sm:$0xf]
    %v119 = vld [vmem:[#allocation7 + $0x38] sm:$0xf]
    %v120 = vld [vmem:[#allocation7 + $0x3c] sm:$0xf]
    %v137 = vunpack.c.l.b16 %v89
    %v138 = vunpack.c.l.b16 %v90
    %v139 = vunpack.c.l.b16 %v91
    %v140 = vunpack.c.l.b16 %v92
    %v141 = vunpack.c.l.b16 %v93
    %v142 = vunpack.c.l.b16 %v94
    %v143 = vunpack.c.l.b16 %v95
    %v144 = vunpack.c.l.b16 %v96
    %v145 = vunpack.c.l.b16 %v97
    %v146 = vunpack.c.l.b16 %v98
    %v147 = vunpack.c.l.b16 %v99
    %v148 = vunpack.c.l.b16 %v100
    %v149 = vunpack.c.l.b16 %v101
    %v150 = vunpack.c.l.b16 %v102
    %v151 = vunpack.c.l.b16 %v103
    %v152 = vunpack.c.l.b16 %v104
    %v153 = vpack.c.b16 %v138, %v137
    %v154 = vpack.c.b16 %v140, %v139
    %v155 = vpack.c.b16 %v142, %v141
    %v156 = vpack.c.b16 %v144, %v143
    %v157 = vpack.c.b16 %v146, %v145
    %v158 = vpack.c.b16 %v148, %v147
    %v159 = vpack.c.b16 %v150, %v149
    %v160 = vpack.c.b16 %v152, %v151
    %v185 = vunpack.c.l.b16 %v105
    %v186 = vunpack.c.l.b16 %v106
    %v187 = vunpack.c.l.b16 %v107
    %v188 = vunpack.c.l.b16 %v108
    %v189 = vunpack.c.l.b16 %v109
    %v190 = vunpack.c.l.b16 %v110
    %v191 = vunpack.c.l.b16 %v111
    %v192 = vunpack.c.l.b16 %v112
    %v193 = vunpack.c.l.b16 %v113
    %v194 = vunpack.c.l.b16 %v114
    %v195 = vunpack.c.l.b16 %v115
    %v196 = vunpack.c.l.b16 %v116
    %v197 = vunpack.c.l.b16 %v117
    %v198 = vunpack.c.l.b16 %v118
    %v199 = vunpack.c.l.b16 %v119
    %v200 = vunpack.c.l.b16 %v120
    %v201 = vpack.c.b16 %v186, %v185
    %v202 = vpack.c.b16 %v188, %v187
    %v203 = vpack.c.b16 %v190, %v189
    %v204 = vpack.c.b16 %v192, %v191
    %v205 = vpack.c.b16 %v194, %v193
    %v206 = vpack.c.b16 %v196, %v195
    %v207 = vpack.c.b16 %v198, %v197
    %v208 = vpack.c.b16 %v200, %v199
    %217 = vmatpush.bf16.msra.mxu0 %v208
    %218 = vmatpush.bf16.msra.mxu0 %v207
    %219 = vmatpush.bf16.msra.mxu0 %v206
    %220 = vmatpush.bf16.msra.mxu0 %v205
    %221 = vmatpush.bf16.msra.mxu0 %v204
    %222 = vmatpush.bf16.msra.mxu0 %v203
    %223 = vmatpush.bf16.msra.mxu0 %v202
    %224 = vmatpush.bf16.msra.mxu0 %v201
    %225 = vmatmul.bf16.gmra.mxu0 %v153
    %v226 = vpop.f32.mrf.mxu0
    %v227 = vadd.f32 0.0, %v226
    %v228 = vpop.f32.mrf.mxu0
    %v229 = vadd.f32 0.0, %v228
    %230 = vmatmul.bf16.gmra.mxu0 %v154
    %v231 = vpop.f32.mrf.mxu0
    %v232 = vadd.f32 0.0, %v231
    %v233 = vpop.f32.mrf.mxu0
    %v234 = vadd.f32 0.0, %v233
    %235 = vmatmul.bf16.gmra.mxu0 %v155
    %v236 = vpop.f32.mrf.mxu0
    %v237 = vadd.f32 0.0, %v236
    %v238 = vpop.f32.mrf.mxu0
    %v239 = vadd.f32 0.0, %v238
    %240 = vmatmul.bf16.gmra.mxu0 %v156
    %v241 = vpop.f32.mrf.mxu0
    %v242 = vadd.f32 0.0, %v241
    %v243 = vpop.f32.mrf.mxu0
    %v244 = vadd.f32 0.0, %v243
    %245 = vmatmul.bf16.gmra.mxu0 %v157
    %v246 = vpop.f32.mrf.mxu0
    %v247 = vadd.f32 0.0, %v246
    %v248 = vpop.f32.mrf.mxu0
    %v249 = vadd.f32 0.0, %v248
    %250 = vmatmul.bf16.gmra.mxu0 %v158
    %v251 = vpop.f32.mrf.mxu0
    %v252 = vadd.f32 0.0, %v251
    %v253 = vpop.f32.mrf.mxu0
    %v254 = vadd.f32 0.0, %v253
    %255 = vmatmul.bf16.gmra.mxu0 %v159
    %v256 = vpop.f32.mrf.mxu0
    %v257 = vadd.f32 0.0, %v256
    %v258 = vpop.f32.mrf.mxu0
    %v259 = vadd.f32 0.0, %v258
    %260 = vmatmul.bf16.gmra.mxu0 %v160
    %v261 = vpop.f32.mrf.mxu0
    %v262 = vadd.f32 0.0, %v261
    %v263 = vpop.f32.mrf.mxu0
    %v264 = vadd.f32 0.0, %v263
    %265 = vdwg.mxu0
    %v266 = vld [vmem:[#allocation8] sm:$0xff]
    %v267 = vld [vmem:[#allocation8 + $0x8] sm:$0xff]
    %v268 = vld [vmem:[#allocation8 + $0x10] sm:$0xff]
    %v269 = vld [vmem:[#allocation8 + $0x18] sm:$0xff]
    %v270 = vld [vmem:[#allocation8 + $0x20] sm:$0xff]
    %v271 = vld [vmem:[#allocation8 + $0x28] sm:$0xff]
    %v272 = vld [vmem:[#allocation8 + $0x30] sm:$0xff]
    %v273 = vld [vmem:[#allocation8 + $0x38] sm:$0xff]
    %v274 = vld [vmem:[#allocation8 + $0x40] sm:$0xff]
    %v275 = vld [vmem:[#allocation8 + $0x48] sm:$0xff]
    %v276 = vld [vmem:[#allocation8 + $0x50] sm:$0xff]
    %v277 = vld [vmem:[#allocation8 + $0x58] sm:$0xff]
    %v278 = vld [vmem:[#allocation8 + $0x60] sm:$0xff]
    %v279 = vld [vmem:[#allocation8 + $0x68] sm:$0xff]
    %v280 = vld [vmem:[#allocation8 + $0x70] sm:$0xff]
    %v281 = vld [vmem:[#allocation8 + $0x78] sm:$0xff]
    %v282 = vld [vmem:[#allocation2] sm:$0xf]
    %v283 = vld [vmem:[#allocation2 + $0x4] sm:$0xf]
    %v284 = vld [vmem:[#allocation2 + $0x8] sm:$0xf]
    %v285 = vld [vmem:[#allocation2 + $0xc] sm:$0xf]
    %v286 = vld [vmem:[#allocation2 + $0x10] sm:$0xf]
    %v287 = vld [vmem:[#allocation2 + $0x14] sm:$0xf]
    %v288 = vld [vmem:[#allocation2 + $0x18] sm:$0xf]
    %v289 = vld [vmem:[#allocation2 + $0x1c] sm:$0xf]
    %v290 = vld [vmem:[#allocation2 + $0x20] sm:$0xf]
    %v291 = vld [vmem:[#allocation2 + $0x24] sm:$0xf]
    %v292 = vld [vmem:[#allocation2 + $0x28] sm:$0xf]
    %v293 = vld [vmem:[#allocation2 + $0x2c] sm:$0xf]
    %v294 = vld [vmem:[#allocation2 + $0x30] sm:$0xf]
    %v295 = vld [vmem:[#allocation2 + $0x34] sm:$0xf]
    %v296 = vld [vmem:[#allocation2 + $0x38] sm:$0xf]
    %v297 = vld [vmem:[#allocation2 + $0x3c] sm:$0xf]
    %v298 = vpack.c.bf16 %v229, %v227
    %v299 = vpack.c.bf16 %v234, %v232
    %v300 = vpack.c.bf16 %v239, %v237
    %v301 = vpack.c.bf16 %v244, %v242
    %v302 = vpack.c.bf16 %v249, %v247
    %v303 = vpack.c.bf16 %v254, %v252
    %v304 = vpack.c.bf16 %v259, %v257
    %v305 = vpack.c.bf16 %v264, %v262
    %v322 = vunpack.c.l.b16 %v282
    %v323 = vunpack.c.l.b16 %v283
    %v324 = vunpack.c.l.b16 %v284
    %v325 = vunpack.c.l.b16 %v285
    %v326 = vunpack.c.l.b16 %v286
    %v327 = vunpack.c.l.b16 %v287
    %v328 = vunpack.c.l.b16 %v288
    %v329 = vunpack.c.l.b16 %v289
    %v330 = vunpack.c.l.b16 %v290
    %v331 = vunpack.c.l.b16 %v291
    %v332 = vunpack.c.l.b16 %v292
    %v333 = vunpack.c.l.b16 %v293
    %v334 = vunpack.c.l.b16 %v294
    %v335 = vunpack.c.l.b16 %v295
    %v336 = vunpack.c.l.b16 %v296
    %v337 = vunpack.c.l.b16 %v297
    %v338 = vpack.c.b16 %v323, %v322
    %v339 = vpack.c.b16 %v325, %v324
    %v340 = vpack.c.b16 %v327, %v326
    %v341 = vpack.c.b16 %v329, %v328
    %v342 = vpack.c.b16 %v331, %v330
    %v343 = vpack.c.b16 %v333, %v332
    %v344 = vpack.c.b16 %v335, %v334
    %v345 = vpack.c.b16 %v337, %v336
    %354 = vmatpush.bf16.msra.mxu0 %v305
    %355 = vmatpush.bf16.msra.mxu0 %v304
    %356 = vmatpush.bf16.msra.mxu0 %v303
    %357 = vmatpush.bf16.msra.mxu0 %v302
    %358 = vmatpush.bf16.msra.mxu0 %v301
    %359 = vmatpush.bf16.msra.mxu0 %v300
    %360 = vmatpush.bf16.msra.mxu0 %v299
    %361 = vmatpush.bf16.msra.mxu0 %v298
    %362 = vmatmul.bf16.gmra.mxu0 %v338
    %v363 = vpop.f32.mrf.mxu0
    %v364 = vadd.f32 0.0, %v363
    %v365 = vpop.f32.mrf.mxu0
    %v366 = vadd.f32 0.0, %v365
    %367 = vmatmul.bf16.gmra.mxu0 %v339
    %v368 = vpop.f32.mrf.mxu0
    %v369 = vadd.f32 0.0, %v368
    %v370 = vpop.f32.mrf.mxu0
    %v371 = vadd.f32 0.0, %v370
    %372 = vmatmul.bf16.gmra.mxu0 %v340
    %v373 = vpop.f32.mrf.mxu0
    %v374 = vadd.f32 0.0, %v373
    %v375 = vpop.f32.mrf.mxu0
    %v376 = vadd.f32 0.0, %v375
    %377 = vmatmul.bf16.gmra.mxu0 %v341
    %v378 = vpop.f32.mrf.mxu0
    %v379 = vadd.f32 0.0, %v378
    %v380 = vpop.f32.mrf.mxu0
    %v381 = vadd.f32 0.0, %v380
    %382 = vmatmul.bf16.gmra.mxu0 %v342
    %v383 = vpop.f32.mrf.mxu0
    %v384 = vadd.f32 0.0, %v383
    %v385 = vpop.f32.mrf.mxu0
    %v386 = vadd.f32 0.0, %v385
    %387 = vmatmul.bf16.gmra.mxu0 %v343
    %v388 = vpop.f32.mrf.mxu0
    %v389 = vadd.f32 0.0, %v388
    %v390 = vpop.f32.mrf.mxu0
    %v391 = vadd.f32 0.0, %v390
    %392 = vmatmul.bf16.gmra.mxu0 %v344
    %v393 = vpop.f32.mrf.mxu0
    %v394 = vadd.f32 0.0, %v393
    %v395 = vpop.f32.mrf.mxu0
    %v396 = vadd.f32 0.0, %v395
    %397 = vmatmul.bf16.gmra.mxu0 %v345
    %v398 = vpop.f32.mrf.mxu0
    %v399 = vadd.f32 0.0, %v398
    %v400 = vpop.f32.mrf.mxu0
    %v401 = vadd.f32 0.0, %v400
    %402 = vdwg.mxu0
    %v403 = vadd.f32 %v266, %v364
    %v404 = vadd.f32 %v267, %v366
    %v405 = vadd.f32 %v268, %v369
    %v406 = vadd.f32 %v269, %v371
    %v407 = vadd.f32 %v270, %v374
    %v408 = vadd.f32 %v271, %v376
    %v409 = vadd.f32 %v272, %v379
    %v410 = vadd.f32 %v273, %v381
    %v411 = vadd.f32 %v274, %v384
    %v412 = vadd.f32 %v275, %v386
    %v413 = vadd.f32 %v276, %v389
    %v414 = vadd.f32 %v277, %v391
    %v415 = vadd.f32 %v278, %v394
    %v416 = vadd.f32 %v279, %v396
    %v417 = vadd.f32 %v280, %v399
    %v418 = vadd.f32 %v281, %v401
    %419 = vst [vmem:[#allocation8] sm:$0xff] %v403
    %420 = vst [vmem:[#allocation8 + $0x8] sm:$0xff] %v404
    %421 = vst [vmem:[#allocation8 + $0x10] sm:$0xff] %v405
    %422 = vst [vmem:[#allocation8 + $0x18] sm:$0xff] %v406
    %423 = vst [vmem:[#allocation8 + $0x20] sm:$0xff] %v407
    %424 = vst [vmem:[#allocation8 + $0x28] sm:$0xff] %v408
    %425 = vst [vmem:[#allocation8 + $0x30] sm:$0xff] %v409
    %426 = vst [vmem:[#allocation8 + $0x38] sm:$0xff] %v410
    %427 = vst [vmem:[#allocation8 + $0x40] sm:$0xff] %v411
    %428 = vst [vmem:[#allocation8 + $0x48] sm:$0xff] %v412
    %429 = vst [vmem:[#allocation8 + $0x50] sm:$0xff] %v413
    %430 = vst [vmem:[#allocation8 + $0x58] sm:$0xff] %v414
    %431 = vst [vmem:[#allocation8 + $0x60] sm:$0xff] %v415
    %432 = vst [vmem:[#allocation8 + $0x68] sm:$0xff] %v416
    %433 = vst [vmem:[#allocation8 + $0x70] sm:$0xff] %v417
    %434 = vst [vmem:[#allocation8 + $0x78] sm:$0xff] %v418
    // Predicated region
    $region34: #{tpu_custom_call.1} parent=1 // pred_check
      _
    $region35: #{tpu_custom_call.1} parent=1 // pred_check_branch
      %436 = sbr.rel (0) target = $region37
    $region36: #{tpu_custom_call.1} parent=1 // pred_region
      %438 = vsyncadd [#allocation4], 0
      %s439 = sshll.u32 [#allocation8], 4
      %s440 = int_to_ptr.vmem [resolvable:$true] %s439
      %s441 = sshll.u32 %s4, 4
      %s442 = int_to_ptr.hbm [resolvable:$true] %s441
      %447 = dma.vmem_to_hbm [thread:$0]  %s440, 2048, %s442, [#allocation4], 128, 128, 8
    $region37: #{tpu_custom_call.1} parent=1 // pred_fallthru
      _
    // Predicated region
    $region38: #{tpu_custom_call.1} parent=1 // pred_check
      _
    $region39: #{tpu_custom_call.1} parent=1 // pred_check_branch
      %449 = sbr.rel (0) target = $region41
    $region40: #{tpu_custom_call.1} parent=1 // pred_region
      %451 = dma.done [#allocation4], 2048
    $region41: #{tpu_custom_call.1} parent=1 // pred_fallthru
      _
    %452 = vsyncpa [#allocation3], 1
    %453 = vsyncpa [#allocation6], 1
    %454 = vsyncpa [#allocation4], 1

</llo_original>
